<compile_context>
chip_gen: v5e
topology: v5e:2x2
jax: 0.10.0
libtpu: 0.0.40
codegen_flags: <defaults>
</compile_context>

<pallas_src>
import jax
import jax.numpy as jnp
from jax.experimental import pallas as pl
from jax.experimental.pallas import tpu as pltpu


def _round_up(n, m):
    return ((n + m - 1) // m) * m


def dqn_kernel(x_ref, w1_ref, b1_ref, w2_ref, b2_ref, w3_ref, b3_ref, out_ref):
    # fc1 + relu  (bf16 MXU operands, f32 accumulate, f32 elementwise)
    x = x_ref[...]
    h1 = jnp.dot(x, w1_ref[...], preferred_element_type=jnp.float32) + b1_ref[...]
    h1 = jnp.maximum(h1, 0.0)
    # fc2 + relu
    h2 = jnp.dot(h1.astype(w2_ref.dtype), w2_ref[...],
                 preferred_element_type=jnp.float32) + b2_ref[...]
    h2 = jnp.maximum(h2, 0.0)
    # fc3 (no activation). Output width padded to 128 lanes -> unmasked stores.
    out_ref[...] = jnp.dot(h2.astype(w3_ref.dtype), w3_ref[...],
                           preferred_element_type=jnp.float32) + b3_ref[...]


def dqn_forward(x, params, *, b_tile=512):
    """Pallas forward pass of the 3-layer DQN MLP.

    x: (B, input_dim) float32
    params: dict with w1 (in,128), b1 (1,128), w2 (128,64), b2 (1,64),
            w3 (64,out), b3 (1,out)  -- weights already transposed to (in, out).
    Returns (B, out) float32 Q-values.
    """
    B, in_dim = x.shape
    h1_dim = params["w1"].shape[1]      # 128
    h2_dim = params["w2"].shape[1]      # 64
    out_dim = params["w3"].shape[1]
    out_pad = _round_up(max(out_dim, 128), 128)   # lane-dense output width

    # Zero-pad fc3 to 128 output lanes (exact: padded columns are zero, sliced off).
    w3p = jnp.zeros((h2_dim, out_pad), params["w3"].dtype).at[:, :out_dim].set(params["w3"])
    b3p = jnp.zeros((1, out_pad), params["b3"].dtype).at[:, :out_dim].set(params["b3"])

    # Batch tile: multiple of 16 (bf16 sublane packing), capped at b_tile rows.
    bt = min(b_tile, _round_up(B, 16))
    Bp = _round_up(B, bt)
    if Bp != B:
        x = jnp.pad(x, ((0, Bp - B), (0, 0)))
    grid = (Bp // bt,)

    # bf16 operands for the MXU; biases stay f32 (added to the f32 accumulator).
    x_bf = x.astype(jnp.bfloat16)
    w1 = params["w1"].astype(jnp.bfloat16)
    w2 = params["w2"].astype(jnp.bfloat16)
    w3 = w3p.astype(jnp.bfloat16)
    b1 = params["b1"].astype(jnp.float32)
    b2 = params["b2"].astype(jnp.float32)
    b3 = b3p.astype(jnp.float32)

    flops = 2 * Bp * (in_dim * h1_dim + h1_dim * h2_dim + h2_dim * out_pad)
    bytes_accessed = (
        x_bf.size * 2 + w1.size * 2 + w2.size * 2 + w3.size * 2
        + (b1.size + b2.size + b3.size) * 4 + Bp * out_pad * 4)

    # TODO(synk): for the B=8 online/target inference path, fusing both network
    # forwards + argmax/TD-target math into one pallas_call would amortize the
    # per-call launch overhead; that lives in the training loop, not this module.
    out = pl.pallas_call(
        dqn_kernel,
        out_shape=jax.ShapeDtypeStruct((Bp, out_pad), jnp.float32),
        grid=grid,
        in_specs=[
            pl.BlockSpec((bt, in_dim), lambda i: (i, 0)),        # x: streamed over batch
            pl.BlockSpec((in_dim, h1_dim), lambda i: (0, 0)),    # w1: resident in VMEM
            pl.BlockSpec((1, h1_dim), lambda i: (0, 0)),         # b1
            pl.BlockSpec((h1_dim, h2_dim), lambda i: (0, 0)),    # w2
            pl.BlockSpec((1, h2_dim), lambda i: (0, 0)),         # b2
            pl.BlockSpec((h2_dim, out_pad), lambda i: (0, 0)),   # w3 (padded to 128)
            pl.BlockSpec((1, out_pad), lambda i: (0, 0)),        # b3 (padded to 128)
        ],
        out_specs=pl.BlockSpec((bt, out_pad), lambda i: (i, 0)),
        compiler_params=pltpu.CompilerParams(
            dimension_semantics=("parallel",),   # shards batch across TCs on v7x
        ),
        cost_estimate=pl.CostEstimate(
            flops=flops, transcendentals=0, bytes_accessed=bytes_accessed),
    )(x_bf, w1, b1, w2, b2, w3, b3)

    return out[:B, :out_dim]


def init_dqn_params(key, input_dim, output_dim):
    """Deterministic init matching PyTorch nn.Linear default (uniform +-1/sqrt(fan_in))."""
    def linear(k, fan_in, fan_out):
        k_w, k_b = jax.random.split(k)
        bound = 1.0 / jnp.sqrt(fan_in)
        # stored as (in, out) so the kernel does x @ W
        w = jax.random.uniform(k_w, (fan_in, fan_out), jnp.float32, -bound, bound)
        b = jax.random.uniform(k_b, (1, fan_out), jnp.float32, -bound, bound)
        return w, b

    k1, k2, k3 = jax.random.split(key, 3)
    w1, b1 = linear(k1, input_dim, 128)
    w2, b2 = linear(k2, 128, 64)
    w3, b3 = linear(k3, 64, output_dim)
    return {"w1": w1, "b1": b1, "w2": w2, "b2": b2, "w3": w3, "b3": b3}


def dqn_ref_f32(x, p):
    """Pure f32 reference (exact PyTorch-equivalent math)."""
    h1 = jnp.maximum(x @ p["w1"] + p["b1"], 0.0)
    h2 = jnp.maximum(h1 @ p["w2"] + p["b2"], 0.0)
    return h2 @ p["w3"] + p["b3"]


def dqn_ref_bf16(x, p):
    """Pure-JAX reference using the same bf16-operand / f32-accumulate math as the kernel."""
    bf = jnp.bfloat16
    h1 = jnp.maximum(
        jnp.dot(x.astype(bf), p["w1"].astype(bf),
                preferred_element_type=jnp.float32) + p["b1"], 0.0)
    h2 = jnp.maximum(
        jnp.dot(h1.astype(bf), p["w2"].astype(bf),
                preferred_element_type=jnp.float32) + p["b2"], 0.0)
    return jnp.dot(h2.astype(bf), p["w3"].astype(bf),
                   preferred_element_type=jnp.float32) + p["b3"]


if __name__ == "__main__":
    key = jax.random.PRNGKey(0)
    k_x, k_p, k_big = jax.random.split(key, 3)

    # CartPole: input_dim=4 (state), output_dim=2 (actions); small inference batch.
    batch, input_dim, output_dim = 8, 4, 2
    x = jax.random.normal(k_x, (batch, input_dim), jnp.float32)
    params = init_dqn_params(k_p, input_dim, output_dim)

    out = dqn_forward(x, params)
    out = jax.block_until_ready(out)
    assert out.shape == (batch, output_dim)
    assert jnp.allclose(out, dqn_ref_bf16(x, params), atol=1e-3, rtol=1e-3)
    assert jnp.allclose(out, dqn_ref_f32(x, params), atol=5e-2, rtol=5e-2)

    # Replay-batch sized call: exercises the batch grid (multiple tiles + padding).
    big_batch = 600
    x_big = jax.random.normal(k_big, (big_batch, input_dim), jnp.float32)
    out_big = jax.block_until_ready(dqn_forward(x_big, params))
    assert out_big.shape == (big_batch, output_dim)
    assert jnp.allclose(out_big, dqn_ref_bf16(x_big, params), atol=1e-3, rtol=1e-3)

    print("KERNEL_OK")
</pallas_src>

<mosaic_0001>
module attributes {stable_mosaic.version = 11 : i64} {
  func.func @dqn_kernel(%arg0: i32, %arg1: memref<16x4xbf16, #tpu.memory_space<vmem>>, %arg2: memref<4x128xbf16, #tpu.memory_space<vmem>>, %arg3: memref<1x128xf32, #tpu.memory_space<vmem>>, %arg4: memref<128x64xbf16, #tpu.memory_space<vmem>>, %arg5: memref<1x64xf32, #tpu.memory_space<vmem>>, %arg6: memref<64x128xbf16, #tpu.memory_space<vmem>>, %arg7: memref<1x128xf32, #tpu.memory_space<vmem>>, %arg8: memref<16x128xf32, #tpu.memory_space<vmem>>) attributes {dimension_semantics = [#tpu.dimension_semantics<parallel>], iteration_bounds = array<i64: 1>, scalar_prefetch = 0 : i64, scratch_operands = 0 : i64, tpu.core_type = #tpu.core_type<tc>, window_params = [{transform_indices = @transform_0, window_bounds = array<i64: 16, 4>}, {pipeline_mode = #tpu.pipeline_mode<synchronous>, transform_indices = @transform_1, window_bounds = array<i64: 4, 128>}, {pipeline_mode = #tpu.pipeline_mode<synchronous>, transform_indices = @transform_2, window_bounds = array<i64: 1, 128>}, {pipeline_mode = #tpu.pipeline_mode<synchronous>, transform_indices = @transform_3, window_bounds = array<i64: 128, 64>}, {pipeline_mode = #tpu.pipeline_mode<synchronous>, transform_indices = @transform_4, window_bounds = array<i64: 1, 64>}, {pipeline_mode = #tpu.pipeline_mode<synchronous>, transform_indices = @transform_5, window_bounds = array<i64: 64, 128>}, {pipeline_mode = #tpu.pipeline_mode<synchronous>, transform_indices = @transform_6, window_bounds = array<i64: 1, 128>}, {transform_indices = @transform_7, window_bounds = array<i64: 16, 128>}]} {
    %c0 = arith.constant 0 : index
    %c0_0 = arith.constant 0 : index
    %0 = vector.load %arg1[%c0, %c0_0] : memref<16x4xbf16, #tpu.memory_space<vmem>>, vector<16x4xbf16>
    %c0_1 = arith.constant 0 : index
    %c0_2 = arith.constant 0 : index
    %1 = vector.load %arg2[%c0_1, %c0_2] : memref<4x128xbf16, #tpu.memory_space<vmem>>, vector<4x128xbf16>
    %cst = arith.constant dense<0.000000e+00> : vector<16x128xf32>
    %2 = tpu.matmul %0, %1, %cst {dimension_numbers = #tpu.dot_dimension_numbers<[1], [0], [0], [1], [0, 0, 1, 1], [], []>} : vector<16x4xbf16>, vector<4x128xbf16>, vector<16x128xf32> -> vector<16x128xf32>
    %c0_3 = arith.constant 0 : index
    %c0_4 = arith.constant 0 : index
    %3 = vector.load %arg3[%c0_3, %c0_4] : memref<1x128xf32, #tpu.memory_space<vmem>>, vector<1x128xf32>
    %4 = vector.broadcast %3 : vector<1x128xf32> to vector<16x128xf32>
    %5 = arith.addf %2, %4 : vector<16x128xf32>
    %cst_5 = arith.constant 0.000000e+00 : f32
    %6 = vector.broadcast %cst_5 : f32 to vector<16x128xf32>
    %7 = arith.maximumf %5, %6 : vector<16x128xf32>
    %8 = arith.truncf %7 : vector<16x128xf32> to vector<16x128xbf16>
    %c0_6 = arith.constant 0 : index
    %c0_7 = arith.constant 0 : index
    %9 = vector.load %arg4[%c0_6, %c0_7] : memref<128x64xbf16, #tpu.memory_space<vmem>>, vector<128x64xbf16>
    %cst_8 = arith.constant dense<0.000000e+00> : vector<16x64xf32>
    %10 = tpu.matmul %8, %9, %cst_8 {dimension_numbers = #tpu.dot_dimension_numbers<[1], [0], [0], [1], [0, 0, 1, 1], [], []>} : vector<16x128xbf16>, vector<128x64xbf16>, vector<16x64xf32> -> vector<16x64xf32>
    %c0_9 = arith.constant 0 : index
    %c0_10 = arith.constant 0 : index
    %11 = vector.load %arg5[%c0_9, %c0_10] : memref<1x64xf32, #tpu.memory_space<vmem>>, vector<1x64xf32>
    %12 = vector.broadcast %11 : vector<1x64xf32> to vector<16x64xf32>
    %13 = arith.addf %10, %12 : vector<16x64xf32>
    %cst_11 = arith.constant 0.000000e+00 : f32
    %14 = vector.broadcast %cst_11 : f32 to vector<16x64xf32>
    %15 = arith.maximumf %13, %14 : vector<16x64xf32>
    %16 = arith.truncf %15 : vector<16x64xf32> to vector<16x64xbf16>
    %c0_12 = arith.constant 0 : index
    %c0_13 = arith.constant 0 : index
    %17 = vector.load %arg6[%c0_12, %c0_13] : memref<64x128xbf16, #tpu.memory_space<vmem>>, vector<64x128xbf16>
    %cst_14 = arith.constant dense<0.000000e+00> : vector<16x128xf32>
    %18 = tpu.matmul %16, %17, %cst_14 {dimension_numbers = #tpu.dot_dimension_numbers<[1], [0], [0], [1], [0, 0, 1, 1], [], []>} : vector<16x64xbf16>, vector<64x128xbf16>, vector<16x128xf32> -> vector<16x128xf32>
    %c0_15 = arith.constant 0 : index
    %c0_16 = arith.constant 0 : index
    %19 = vector.load %arg7[%c0_15, %c0_16] : memref<1x128xf32, #tpu.memory_space<vmem>>, vector<1x128xf32>
    %20 = vector.broadcast %19 : vector<1x128xf32> to vector<16x128xf32>
    %21 = arith.addf %18, %20 : vector<16x128xf32>
    %c0_17 = arith.constant 0 : index
    %c0_18 = arith.constant 0 : index
    %22 = vector.load %arg8[%c0_17, %c0_18] : memref<16x128xf32, #tpu.memory_space<vmem>>, vector<16x128xf32>
    tpu.vector_store %arg8[%c0_17, %c0_18], %21 {strides = array<i32>} : memref<16x128xf32, #tpu.memory_space<vmem>>, vector<16x128xf32>,
    return
  }
  func.func @transform_0(%arg0: i32) -> (i32, i32) {
    %c0_i32 = arith.constant 0 : i32
    %c0_i32_0 = arith.constant 0 : i32
    return %arg0, %c0_i32 : i32, i32
  }
  func.func @transform_1(%arg0: i32) -> (i32, i32) {
    %c0_i32 = arith.constant 0 : i32
    %c0_i32_0 = arith.constant 0 : i32
    %c0_i32_1 = arith.constant 0 : i32
    return %c0_i32, %c0_i32_0 : i32, i32
  }
  func.func @transform_2(%arg0: i32) -> (i32, i32) {
    %c0_i32 = arith.constant 0 : i32
    %c0_i32_0 = arith.constant 0 : i32
    %c0_i32_1 = arith.constant 0 : i32
    return %c0_i32, %c0_i32_0 : i32, i32
  }
  func.func @transform_3(%arg0: i32) -> (i32, i32) {
    %c0_i32 = arith.constant 0 : i32
    %c0_i32_0 = arith.constant 0 : i32
    %c0_i32_1 = arith.constant 0 : i32
    return %c0_i32, %c0_i32_0 : i32, i32
  }
  func.func @transform_4(%arg0: i32) -> (i32, i32) {
    %c0_i32 = arith.constant 0 : i32
    %c0_i32_0 = arith.constant 0 : i32
    %c0_i32_1 = arith.constant 0 : i32
    return %c0_i32, %c0_i32_0 : i32, i32
  }
  func.func @transform_5(%arg0: i32) -> (i32, i32) {
    %c0_i32 = arith.constant 0 : i32
    %c0_i32_0 = arith.constant 0 : i32
    %c0_i32_1 = arith.constant 0 : i32
    return %c0_i32, %c0_i32_0 : i32, i32
  }
  func.func @transform_6(%arg0: i32) -> (i32, i32) {
    %c0_i32 = arith.constant 0 : i32
    %c0_i32_0 = arith.constant 0 : i32
    %c0_i32_1 = arith.constant 0 : i32
    return %c0_i32, %c0_i32_0 : i32, i32
  }
  func.func @transform_7(%arg0: i32) -> (i32, i32) {
    %c0_i32 = arith.constant 0 : i32
    %c0_i32_0 = arith.constant 0 : i32
    return %arg0, %c0_i32 : i32, i32
  }
}

</mosaic_0001>

<llo_original>
// kernel: tpu_custom_call.1
$region0: #{tpu_custom_call.1}
  #allocation0 [shape = 'u32[]', space=smem, size = 0x4, offset = 0x4, fixed_abs, tag = 'smem constant byte address 0x4 - core index']
  #allocation1 [shape = 'u32[72,128]{1,0:T(1,128)}', space=vmem, size = 0x9000, scoped, tag = 'internal scratch']
  %s0 = inlined_call_operand.vmem [shape: bf16[16,4], index: 0, kind: input, shape index: {}]
  %s1 = inlined_call_operand.vmem [shape: bf16[4,128], index: 1, kind: input, shape index: {}]
  %s2 = inlined_call_operand.vmem [shape: f32[1,128], index: 2, kind: input, shape index: {}]
  %s3 = inlined_call_operand.vmem [shape: bf16[128,64], index: 3, kind: input, shape index: {}]
  %s4 = inlined_call_operand.vmem [shape: f32[1,64], index: 4, kind: input, shape index: {}]
  %s5 = inlined_call_operand.vmem [shape: bf16[64,128], index: 5, kind: input, shape index: {}]
  %s6 = inlined_call_operand.vmem [shape: f32[1,128], index: 6, kind: input, shape index: {}]
  %s7 = inlined_call_operand.hbm [shape: f32[16,128], index: 7, kind: output, shape index: {}]
  %s8 = sld [smem:[#allocation0]]
  $region38: #{tpu_custom_call.1} parent=0
    _
  %s10 = ssub.s32 1, %s8
  %s11 = scalar_select 0, %s10, %s8
  $region1: #{tpu_custom_call.1} parent=0
    #allocation2 [shape = 'u8[8192]{0}', space=vmem, size = 0x2000, scoped, tag = 'output window, operand 0, single buffered']
    #allocation3 [shape = 's32[1]{0}', space=sflag, size = 0x4, scoped, tag = 'scoped memory for tpu_custom_call.1']
    %12 = vsyncpa [#allocation3], 0
    // Predicated region
    $region2: #{tpu_custom_call.1} parent=1 // pred_check
      _
    $region3: #{tpu_custom_call.1} parent=1 // pred_check_branch
      %14 = sbr.rel (0) target = $region5
    $region4: #{tpu_custom_call.1} parent=1 // pred_region
      _
    $region5: #{tpu_custom_call.1} parent=1 // pred_fallthru
      _
    // Predicated region
    $region6: #{tpu_custom_call.1} parent=1 // pred_check
      _
    $region7: #{tpu_custom_call.1} parent=1 // pred_check_branch
      %16 = sbr.rel (0) target = $region9
    $region8: #{tpu_custom_call.1} parent=1 // pred_region
      _
    $region9: #{tpu_custom_call.1} parent=1 // pred_fallthru
      _
    // Predicated region
    $region10: #{tpu_custom_call.1} parent=1 // pred_check
      _
    $region11: #{tpu_custom_call.1} parent=1 // pred_check_branch
      %18 = sbr.rel (0) target = $region13
    $region12: #{tpu_custom_call.1} parent=1 // pred_region
      _
    $region13: #{tpu_custom_call.1} parent=1 // pred_fallthru
      _
    // Predicated region
    $region14: #{tpu_custom_call.1} parent=1 // pred_check
      _
    $region15: #{tpu_custom_call.1} parent=1 // pred_check_branch
      %20 = sbr.rel (0) target = $region17
    $region16: #{tpu_custom_call.1} parent=1 // pred_region
      _
    $region17: #{tpu_custom_call.1} parent=1 // pred_fallthru
      _
    // Predicated region
    $region18: #{tpu_custom_call.1} parent=1 // pred_check
      _
    $region19: #{tpu_custom_call.1} parent=1 // pred_check_branch
      %22 = sbr.rel (0) target = $region21
    $region20: #{tpu_custom_call.1} parent=1 // pred_region
      _
    $region21: #{tpu_custom_call.1} parent=1 // pred_fallthru
      _
    // Predicated region
    $region22: #{tpu_custom_call.1} parent=1 // pred_check
      _
    $region23: #{tpu_custom_call.1} parent=1 // pred_check_branch
      %24 = sbr.rel (0) target = $region25
    $region24: #{tpu_custom_call.1} parent=1 // pred_region
      _
    $region25: #{tpu_custom_call.1} parent=1 // pred_fallthru
      _
    // Predicated region
    $region26: #{tpu_custom_call.1} parent=1 // pred_check
      _
    $region27: #{tpu_custom_call.1} parent=1 // pred_check_branch
      %26 = sbr.rel (0) target = $region29
    $region28: #{tpu_custom_call.1} parent=1 // pred_region
      _
    $region29: #{tpu_custom_call.1} parent=1 // pred_fallthru
      _
    %v28 = vld [vmem:[%s0] sm:$0xf]
    %v29 = vld [vmem:[%s0 + $0x4] sm:$0xf]
    %v30 = vld [vmem:[%s1] sm:$0x3]
    %v31 = vld [vmem:[%s2] sm:$0x1]
    %v33 = vperm.slane %v31, 0
    %v37 = vunpack.c.l.b16 %v28
    %v38 = vunpack.c.l.b16 %v29
    %v39 = vpack.c.b16 %v38, %v37
    %vm40 = vcmask 31744
    %v42 = vsel %vm40, %v39, 0
    %vm44 = vcmask 1041408
    %v46 = vsel %vm44, %v30, 0
    %48 = vmatpush.bf16.msra.mxu0 0
    %49 = vmatpush.bf16.msra.mxu0 0
    %50 = vmatpush.bf16.msra.mxu0 0
    %51 = vmatpush.bf16.msra.mxu0 0
    %52 = vmatpush.bf16.msra.mxu0 0
    %53 = vmatpush.bf16.msra.mxu0 0
    %54 = vmatpush.bf16.msra.mxu0 0
    %55 = vmatpush.bf16.msra.mxu0 %v46
    %56 = vmatmul.bf16.gmra.mxu0 %v42
    %v57 = vpop.f32.mrf.mxu0
    %v58 = vadd.f32 %v33, %v57
    %v59 = vpop.f32.mrf.mxu0
    %v60 = vadd.f32 %v33, %v59
    %61 = vdwg.mxu0
    %v62 = vmax.f32 %v58, 0.0
    %v63 = vmax.f32 %v60, 0.0
    %v64 = vpack.c.bf16 %v63, %v62
    %v65 = vld [vmem:[%s3] sm:$0xf]
    %v66 = vld [vmem:[%s3 + $0x4] sm:$0xf]
    %v67 = vld [vmem:[%s3 + $0x8] sm:$0xf]
    %v68 = vld [vmem:[%s3 + $0xc] sm:$0xf]
    %v69 = vld [vmem:[%s3 + $0x10] sm:$0xf]
    %v70 = vld [vmem:[%s3 + $0x14] sm:$0xf]
    %v71 = vld [vmem:[%s3 + $0x18] sm:$0xf]
    %v72 = vld [vmem:[%s3 + $0x1c] sm:$0xf]
    %v73 = vld [vmem:[%s3 + $0x20] sm:$0xf]
    %v74 = vld [vmem:[%s3 + $0x24] sm:$0xf]
    %v75 = vld [vmem:[%s3 + $0x28] sm:$0xf]
    %v76 = vld [vmem:[%s3 + $0x2c] sm:$0xf]
    %v77 = vld [vmem:[%s3 + $0x30] sm:$0xf]
    %v78 = vld [vmem:[%s3 + $0x34] sm:$0xf]
    %v79 = vld [vmem:[%s3 + $0x38] sm:$0xf]
    %v80 = vld [vmem:[%s3 + $0x3c] sm:$0xf]
    %v81 = vld [vmem:[%s4] sm:$0x1]
    %v83 = vperm.slane %v81, 0
    %v101 = vunpack.c.l.b16 %v65
    %v102 = vunpack.c.l.b16 %v66
    %v103 = vunpack.c.l.b16 %v67
    %v104 = vunpack.c.l.b16 %v68
    %v105 = vunpack.c.l.b16 %v69
    %v106 = vunpack.c.l.b16 %v70
    %v107 = vunpack.c.l.b16 %v71
    %v108 = vunpack.c.l.b16 %v72
    %v109 = vunpack.c.l.b16 %v73
    %v110 = vunpack.c.l.b16 %v74
    %v111 = vunpack.c.l.b16 %v75
    %v112 = vunpack.c.l.b16 %v76
    %v113 = vunpack.c.l.b16 %v77
    %v114 = vunpack.c.l.b16 %v78
    %v115 = vunpack.c.l.b16 %v79
    %v116 = vunpack.c.l.b16 %v80
    %v117 = vpack.c.b16 %v102, %v101
    %v118 = vpack.c.b16 %v104, %v103
    %v119 = vpack.c.b16 %v106, %v105
    %v120 = vpack.c.b16 %v108, %v107
    %v121 = vpack.c.b16 %v110, %v109
    %v122 = vpack.c.b16 %v112, %v111
    %v123 = vpack.c.b16 %v114, %v113
    %v124 = vpack.c.b16 %v116, %v115
    %133 = vmatpush.bf16.msra.mxu0 %v124
    %134 = vmatpush.bf16.msra.mxu0 %v123
    %135 = vmatpush.bf16.msra.mxu0 %v122
    %136 = vmatpush.bf16.msra.mxu0 %v121
    %137 = vmatpush.bf16.msra.mxu0 %v120
    %138 = vmatpush.bf16.msra.mxu0 %v119
    %139 = vmatpush.bf16.msra.mxu0 %v118
    %140 = vmatpush.bf16.msra.mxu0 %v117
    %141 = vmatmul.bf16.gmra.mxu0 %v64
    %v142 = vpop.f32.mrf.mxu0
    %v143 = vadd.f32 %v83, %v142
    %v144 = vpop.f32.mrf.mxu0
    %v145 = vadd.f32 %v83, %v144
    %146 = vdwg.mxu0
    %v147 = vmax.f32 %v143, 0.0
    %v148 = vmax.f32 %v145, 0.0
    %v149 = vpack.c.bf16 %v148, %v147
    %v150 = vld [vmem:[%s5] sm:$0xf]
    %v151 = vld [vmem:[%s5 + $0x4] sm:$0xf]
    %v152 = vld [vmem:[%s5 + $0x8] sm:$0xf]
    %v153 = vld [vmem:[%s5 + $0xc] sm:$0xf]
    %v154 = vld [vmem:[%s5 + $0x10] sm:$0xf]
    %v155 = vld [vmem:[%s5 + $0x14] sm:$0xf]
    %v156 = vld [vmem:[%s5 + $0x18] sm:$0xf]
    %v157 = vld [vmem:[%s5 + $0x1c] sm:$0xf]
    %v158 = vld [vmem:[%s6] sm:$0x1]
    %v160 = vperm.slane %v158, 0
    %v170 = vunpack.c.l.b16 %v150
    %v171 = vunpack.c.l.b16 %v151
    %v172 = vunpack.c.l.b16 %v152
    %v173 = vunpack.c.l.b16 %v153
    %v174 = vunpack.c.l.b16 %v154
    %v175 = vunpack.c.l.b16 %v155
    %v176 = vunpack.c.l.b16 %v156
    %v177 = vunpack.c.l.b16 %v157
    %v178 = vpack.c.b16 %v171, %v170
    %v179 = vpack.c.b16 %v173, %v172
    %v180 = vpack.c.b16 %v175, %v174
    %v181 = vpack.c.b16 %v177, %v176
    %vm186 = vcmask 523264
    %v188 = vsel %vm186, %v149, 0
    %190 = vmatpush.bf16.msra.mxu0 0
    %191 = vmatpush.bf16.msra.mxu0 0
    %192 = vmatpush.bf16.msra.mxu0 0
    %193 = vmatpush.bf16.msra.mxu0 0
    %194 = vmatpush.bf16.msra.mxu0 %v181
    %195 = vmatpush.bf16.msra.mxu0 %v180
    %196 = vmatpush.bf16.msra.mxu0 %v179
    %197 = vmatpush.bf16.msra.mxu0 %v178
    %198 = vmatmul.bf16.gmra.mxu0 %v188
    %v199 = vpop.f32.mrf.mxu0
    %v200 = vadd.f32 %v160, %v199
    %v201 = vpop.f32.mrf.mxu0
    %v202 = vadd.f32 %v160, %v201
    %203 = vdwg.mxu0
    %204 = vst [vmem:[#allocation2] sm:$0xff] %v200
    %205 = vst [vmem:[#allocation2 + $0x8] sm:$0xff] %v202
    // Predicated region
    $region30: #{tpu_custom_call.1} parent=1 // pred_check
      _
    $region31: #{tpu_custom_call.1} parent=1 // pred_check_branch
      %207 = sbr.rel (0) target = $region33
    $region32: #{tpu_custom_call.1} parent=1 // pred_region
      %209 = vsyncadd [#allocation3], 0
      %s210 = sshll.u32 [#allocation2], 4
      %s211 = int_to_ptr.vmem [resolvable:$true] %s210
      %s212 = sshll.u32 %s7, 4
      %s213 = int_to_ptr.hbm [resolvable:$true] %s212
      %218 = dma.vmem_to_hbm [thread:$0]  %s211, 256, %s213, [#allocation3], 128, 128, 8
    $region33: #{tpu_custom_call.1} parent=1 // pred_fallthru
      _
    // Predicated region
    $region34: #{tpu_custom_call.1} parent=1 // pred_check
      _
    $region35: #{tpu_custom_call.1} parent=1 // pred_check_branch
      %220 = sbr.rel (0) target = $region37
    $region36: #{tpu_custom_call.1} parent=1 // pred_region
      %222 = dma.done [#allocation3], 256
    $region37: #{tpu_custom_call.1} parent=1 // pred_fallthru
      _
    %223 = vsyncpa [#allocation3], 1

</llo_original>
